<compile_context>
chip_gen: v5e
topology: v5e:2x2
jax: 0.10.0
libtpu: 0.0.40
codegen_flags: <defaults>
</compile_context>

<pallas_src>
import jax
import jax.numpy as jnp
from jax.experimental import pallas as pl
from jax.experimental.pallas import tpu as pltpu


def _round_up(n, m):
    return ((n + m - 1) // m) * m


def packed_kernel(x_ref, w_ref, b_ref, pmT_ref, o_ref):
    # Backbone linear: bf16 MXU matmul, f32 accumulate.  x is cast to bf16 in-register
    # (HBM read of x stays a single f32 pass; avoids the ~4-8x slower f32-emulated MXU path).
    h = jnp.dot(
        x_ref[...].astype(jnp.bfloat16),
        w_ref[...],
        preferred_element_type=jnp.float32,
    )
    h = h + b_ref[...]  # bias add in f32 (threshold precision)

    # Binary vector-quantize with codebook {0.0, 1.0}: nearest codeword <=> h >= 0.5.
    # Direct bool -> bf16 pack; no f32 intermediate.
    x_bin = (h >= 0.5).astype(jnp.bfloat16)

    # out[b, c] = sum_f x_bin[b, f] * (P[c, f] - 1) == x_bin @ (P - 1)^T.
    # Operands {0,1} and {-1,0} are exact in bf16; accumulate in f32 -> exact.
    acc = jnp.dot(x_bin, pmT_ref[...], preferred_element_type=jnp.float32)
    o_ref[...] = acc.astype(o_ref.dtype)


def make_packed_forward(w, b, predicate_matrix):
    """One-time parameter prep (hoisted out of the per-call path).

    w: (D, F) backbone weight; b: (1, F) bias; predicate_matrix: (n_classes, F).
    Returns a jitted function x_nchw -> (B, n_classes) f32.
    """
    D, F = w.shape
    C = predicate_matrix.shape[0]

    F_pad = _round_up(F, 128)  # lane-dense hidden dim
    C_pad = _round_up(C, 128)  # lane-dense output (dense vst, no masked partial stores)

    # Backbone weights in bf16 (MXU-native).  Padded feature columns are zero and get
    # bias 0 -> h = 0 < 0.5 -> x_bin = 0 -> contribute nothing.
    w_p = jnp.zeros((D, F_pad), jnp.bfloat16).at[:, :F].set(w.astype(jnp.bfloat16))
    b_p = jnp.zeros((1, F_pad), jnp.float32).at[:, :F].set(b.astype(jnp.float32))
    # Hoisted (P - 1)^T, zero-padded, bf16 ({-1, 0} exact in bf16).
    pmT = jnp.zeros((F_pad, C_pad), jnp.bfloat16).at[:F, :C].set(
        (predicate_matrix.astype(jnp.float32) - 1.0).T.astype(jnp.bfloat16)
    )

    # Output values are integer sums in [-F, 0]: exact in bf16 for F <= 256
    # (halves the output HBM write); f32 otherwise.
    out_dtype = jnp.bfloat16 if F <= 256 else jnp.float32
    out_itemsize = jnp.dtype(out_dtype).itemsize

    def forward(x_nchw):
        B = x_nchw.shape[0]
        # Free reshape; NO padded copy of x (Pallas handles the partial tail block:
        # tail input rows beyond B are undefined but their output rows are dropped,
        # and batch rows are fully independent).
        x_flat = x_nchw.reshape(B, D).astype(jnp.float32)

        # Batch tile: large enough to amortize per-step overhead, small enough that
        # the grid has >= 2 steps (v7x: two TensorCores both get work) and that the
        # double-buffered x tile stays within the default scoped-VMEM budget.
        if B <= 8:
            TB = B  # single tiny block; block dims equal the full array dims
        else:
            tb_half = _round_up(pl.cdiv(B, 2), 8)          # >= 2 grid steps
            tb_vmem = max(8, ((16 * 1024 * 1024) // (D * 4)) // 8 * 8)
            TB = max(8, min(1024, tb_half, tb_vmem))
        grid = (pl.cdiv(B, TB),)

        flops = 2.0 * B * D * F_pad + 2.0 * B * F_pad * C_pad
        bytes_accessed = (
            B * D * 4 + w_p.size * 2 + b_p.size * 4 + pmT.size * 2
            + B * C_pad * out_itemsize
        )

        out_padded = pl.pallas_call(
            packed_kernel,
            out_shape=jax.ShapeDtypeStruct((B, C_pad), out_dtype),
            grid=grid,
            in_specs=[
                pl.BlockSpec((TB, D), lambda i: (i, 0)),        # x: tiled over batch
                pl.BlockSpec((D, F_pad), lambda i: (0, 0)),     # w: resident in VMEM
                pl.BlockSpec((1, F_pad), lambda i: (0, 0)),     # b: resident
                pl.BlockSpec((F_pad, C_pad), lambda i: (0, 0)),  # (P-1)^T: resident
            ],
            out_specs=pl.BlockSpec((TB, C_pad), lambda i: (i, 0)),
            compiler_params=pltpu.CompilerParams(
                dimension_semantics=("parallel",),              # batch tiles -> megacore
            ),
            cost_estimate=pl.CostEstimate(
                flops=int(flops),
                transcendentals=0,
                bytes_accessed=int(bytes_accessed),
            ),
        )(x_flat, w_p, b_p, pmT)

        return out_padded[:B, :C].astype(jnp.float32)

    return jax.jit(forward)


def reference_forward(x_nchw, w, b, predicate_matrix):
    """Pure-JAX reference mirroring the PyTorch module literally (f32 backbone)."""
    B = x_nchw.shape[0]
    D, F = w.shape
    feats = x_nchw.reshape(B, D) @ w + b                     # model(x)
    x_bin = jnp.where(feats >= 0.5, 1.0, 0.0)                # bin_quantize
    x3 = x_bin.reshape(-1, 1, F)                             # (B, 1, F)
    ANDed = x3 * predicate_matrix                            # (B, C, F)
    diff = ANDed - x3
    return diff.sum(axis=2)                                  # (B, C)


def reference_forward_bf16(x_nchw, w, b, predicate_matrix):
    """Reference with the kernel's bf16 backbone numerics (bf16 MXU, f32 accumulate)."""
    B = x_nchw.shape[0]
    D, F = w.shape
    feats = jnp.dot(
        x_nchw.reshape(B, D).astype(jnp.bfloat16),
        w.astype(jnp.bfloat16),
        preferred_element_type=jnp.float32,
    ) + b.astype(jnp.float32)
    x_bin = jnp.where(feats >= 0.5, 1.0, 0.0)
    x3 = x_bin.reshape(-1, 1, F)
    ANDed = x3 * predicate_matrix
    return (ANDed - x3).sum(axis=2)


if __name__ == "__main__":
    # Small shapes consistent with the forward pass.
    B, Cin, H, W = 2, 4, 16, 16          # NCHW image input
    D = Cin * H * W                      # flattened input dim = 1024
    n_features = 32
    n_classes = 8

    key = jax.random.PRNGKey(0)
    k_x, k_w, k_b, k_p = jax.random.split(key, 4)

    x = jax.random.normal(k_x, (B, Cin, H, W), dtype=jnp.float32)

    # Deterministic synthetic parameters (module __init__ shapes):
    #   backbone linear model -> n_features, predicate_matrix (n_classes, n_features)
    w = jax.random.normal(k_w, (D, n_features), dtype=jnp.float32) * (1.0 / jnp.sqrt(float(D)))
    b = jax.random.normal(k_b, (1, n_features), dtype=jnp.float32) * 0.1
    predicate_matrix = jax.random.bernoulli(
        k_p, p=0.5, shape=(n_classes, n_features)
    ).astype(jnp.float32)

    packed_forward = make_packed_forward(w, b, predicate_matrix)

    out = jax.block_until_ready(packed_forward(x))
    assert out.shape == (B, n_classes)

    # Bit-faithful check against a reference using the same bf16 backbone numerics.
    ref_bf16 = reference_forward_bf16(x, w, b, predicate_matrix)
    assert jnp.allclose(out, ref_bf16, atol=1e-5), (out, ref_bf16)

    # Literal f32 module reference: identical unless some h sits within ~1e-3 of the
    # 0.5 binarization threshold (bf16 backbone tolerance).
    h_ref = x.reshape(B, D) @ w + b
    if not bool(jnp.any(jnp.abs(h_ref - 0.5) < 2e-3)):
        ref_f32 = reference_forward(x, w, b, predicate_matrix)
        assert jnp.allclose(out, ref_f32, atol=1e-5), (out, ref_f32)

    # Second smoke test: non-divisible batch -> >= 2 grid steps + partial tail block.
    B2 = 50
    x2 = jax.random.normal(jax.random.PRNGKey(1), (B2, Cin, H, W), dtype=jnp.float32)
    out2 = jax.block_until_ready(packed_forward(x2))
    ref2 = reference_forward_bf16(x2, w, b, predicate_matrix)
    assert out2.shape == (B2, n_classes)
    assert jnp.allclose(out2, ref2, atol=1e-5), (out2, ref2)

    print("KERNEL_OK")
</pallas_src>

<mosaic_0001>
module attributes {stable_mosaic.version = 11 : i64} {
  func.func @packed_kernel(%arg0: i32, %arg1: memref<2x1024xf32, #tpu.memory_space<vmem>>, %arg2: memref<1024x128xbf16, #tpu.memory_space<vmem>>, %arg3: memref<1x128xf32, #tpu.memory_space<vmem>>, %arg4: memref<128x128xbf16, #tpu.memory_space<vmem>>, %arg5: memref<2x128xbf16, #tpu.memory_space<vmem>>) attributes {dimension_semantics = [#tpu.dimension_semantics<parallel>], iteration_bounds = array<i64: 1>, scalar_prefetch = 0 : i64, scratch_operands = 0 : i64, tpu.core_type = #tpu.core_type<tc>, window_params = [{transform_indices = @transform_0, window_bounds = array<i64: 2, 1024>}, {pipeline_mode = #tpu.pipeline_mode<synchronous>, transform_indices = @transform_1, window_bounds = array<i64: 1024, 128>}, {pipeline_mode = #tpu.pipeline_mode<synchronous>, transform_indices = @transform_2, window_bounds = array<i64: 1, 128>}, {pipeline_mode = #tpu.pipeline_mode<synchronous>, transform_indices = @transform_3, window_bounds = array<i64: 128, 128>}, {transform_indices = @transform_4, window_bounds = array<i64: 2, 128>}]} {
    %c0 = arith.constant 0 : index
    %c0_0 = arith.constant 0 : index
    %0 = vector.load %arg1[%c0, %c0_0] : memref<2x1024xf32, #tpu.memory_space<vmem>>, vector<2x1024xf32>
    %1 = arith.truncf %0 : vector<2x1024xf32> to vector<2x1024xbf16>
    %c0_1 = arith.constant 0 : index
    %c0_2 = arith.constant 0 : index
    %2 = vector.load %arg2[%c0_1, %c0_2] : memref<1024x128xbf16, #tpu.memory_space<vmem>>, vector<1024x128xbf16>
    %cst = arith.constant dense<0.000000e+00> : vector<2x128xf32>
    %3 = tpu.matmul %1, %2, %cst {dimension_numbers = #tpu.dot_dimension_numbers<[1], [0], [0], [1], [0, 0, 1, 1], [], []>} : vector<2x1024xbf16>, vector<1024x128xbf16>, vector<2x128xf32> -> vector<2x128xf32>
    %c0_3 = arith.constant 0 : index
    %c0_4 = arith.constant 0 : index
    %4 = vector.load %arg3[%c0_3, %c0_4] : memref<1x128xf32, #tpu.memory_space<vmem>>, vector<1x128xf32>
    %5 = vector.broadcast %4 : vector<1x128xf32> to vector<2x128xf32>
    %6 = arith.addf %3, %5 : vector<2x128xf32>
    %cst_5 = arith.constant 5.000000e-01 : f32
    %7 = vector.broadcast %cst_5 : f32 to vector<2x128xf32>
    %8 = arith.cmpf oge, %6, %7 : vector<2x128xf32>
    %9 = arith.extui %8 : vector<2x128xi1> to vector<2x128xi32>
    %10 = arith.sitofp %9 : vector<2x128xi32> to vector<2x128xf32>
    %11 = arith.truncf %10 : vector<2x128xf32> to vector<2x128xbf16>
    %c0_6 = arith.constant 0 : index
    %c0_7 = arith.constant 0 : index
    %12 = vector.load %arg4[%c0_6, %c0_7] : memref<128x128xbf16, #tpu.memory_space<vmem>>, vector<128x128xbf16>
    %cst_8 = arith.constant dense<0.000000e+00> : vector<2x128xf32>
    %13 = tpu.matmul %11, %12, %cst_8 {dimension_numbers = #tpu.dot_dimension_numbers<[1], [0], [0], [1], [0, 0, 1, 1], [], []>} : vector<2x128xbf16>, vector<128x128xbf16>, vector<2x128xf32> -> vector<2x128xf32>
    %14 = arith.truncf %13 : vector<2x128xf32> to vector<2x128xbf16>
    %c0_9 = arith.constant 0 : index
    %c0_10 = arith.constant 0 : index
    %15 = vector.load %arg5[%c0_9, %c0_10] : memref<2x128xbf16, #tpu.memory_space<vmem>>, vector<2x128xbf16>
    tpu.vector_store %arg5[%c0_9, %c0_10], %14 {strides = array<i32>} : memref<2x128xbf16, #tpu.memory_space<vmem>>, vector<2x128xbf16>,
    return
  }
  func.func @transform_0(%arg0: i32) -> (i32, i32) {
    %c0_i32 = arith.constant 0 : i32
    %c0_i32_0 = arith.constant 0 : i32
    return %arg0, %c0_i32 : i32, i32
  }
  func.func @transform_1(%arg0: i32) -> (i32, i32) {
    %c0_i32 = arith.constant 0 : i32
    %c0_i32_0 = arith.constant 0 : i32
    %c0_i32_1 = arith.constant 0 : i32
    return %c0_i32, %c0_i32_0 : i32, i32
  }
  func.func @transform_2(%arg0: i32) -> (i32, i32) {
    %c0_i32 = arith.constant 0 : i32
    %c0_i32_0 = arith.constant 0 : i32
    %c0_i32_1 = arith.constant 0 : i32
    return %c0_i32, %c0_i32_0 : i32, i32
  }
  func.func @transform_3(%arg0: i32) -> (i32, i32) {
    %c0_i32 = arith.constant 0 : i32
    %c0_i32_0 = arith.constant 0 : i32
    %c0_i32_1 = arith.constant 0 : i32
    return %c0_i32, %c0_i32_0 : i32, i32
  }
  func.func @transform_4(%arg0: i32) -> (i32, i32) {
    %c0_i32 = arith.constant 0 : i32
    %c0_i32_0 = arith.constant 0 : i32
    return %arg0, %c0_i32 : i32, i32
  }
}

</mosaic_0001>

<llo_original>
// kernel: forward.1
$region0: #{forward.1}
  #allocation0 [shape = 'u32[]', space=smem, size = 0x4, offset = 0x4, fixed_abs, tag = 'smem constant byte address 0x4 - core index']
  #allocation1 [shape = 'u32[72,128]{1,0:T(1,128)}', space=vmem, size = 0x9000, scoped, tag = 'internal scratch']
  %s0 = inlined_call_operand.vmem [shape: f32[2,1024], index: 0, kind: input, shape index: {}]
  %s1 = inlined_call_operand.hbm [shape: bf16[1024,128], index: 1, kind: input, shape index: {}]
  %s2 = inlined_call_operand.vmem [shape: f32[1,128], index: 2, kind: input, shape index: {}]
  %s3 = inlined_call_operand.vmem [shape: bf16[128,128], index: 3, kind: input, shape index: {}]
  %s4 = inlined_call_operand.vmem [shape: bf16[2,128], index: 4, kind: output, shape index: {}]
  %s5 = sld [smem:[#allocation0]]
  $region30: #{forward.1} parent=0
    _
  %s7 = ssub.s32 1, %s5
  %s8 = scalar_select 0, %s7, %s5
  $region1: #{forward.1} parent=0
    #allocation2 [shape = 'u8[262144]{0}', space=vmem, size = 0x40000, scoped, tag = 'input window, operand 1, single buffered']
    #allocation3 [shape = 's32[1]{0}', space=sflag, size = 0x4, scoped, tag = 'scoped memory for forward.1']
    %9 = vsyncpa [#allocation3], 0
    // Predicated region
    $region2: #{forward.1} parent=1 // pred_check
      _
    $region3: #{forward.1} parent=1 // pred_check_branch
      %11 = sbr.rel (0) target = $region5
    $region4: #{forward.1} parent=1 // pred_region
      _
    $region5: #{forward.1} parent=1 // pred_fallthru
      _
    // Predicated region
    $region6: #{forward.1} parent=1 // pred_check
      _
    $region7: #{forward.1} parent=1 // pred_check_branch
      %13 = sbr.rel (0) target = $region9
    $region8: #{forward.1} parent=1 // pred_region
      %15 = vsyncadd [#allocation3], 0
      %s16 = sshll.u32 %s1, 4
      %s17 = int_to_ptr.hbm [resolvable:$true] %s16
      %s18 = sshll.u32 [#allocation2], 4
      %s19 = int_to_ptr.vmem [resolvable:$true] %s18
      %24 = dma.hbm_to_vmem [thread:$0]  %s17, 8192, %s19, [#allocation3], 64, 64, 4
    $region9: #{forward.1} parent=1 // pred_fallthru
      _
    // Predicated region
    $region10: #{forward.1} parent=1 // pred_check
      _
    $region11: #{forward.1} parent=1 // pred_check_branch
      %26 = sbr.rel (0) target = $region13
    $region12: #{forward.1} parent=1 // pred_region
      _
    $region13: #{forward.1} parent=1 // pred_fallthru
      _
    // Predicated region
    $region14: #{forward.1} parent=1 // pred_check
      _
    $region15: #{forward.1} parent=1 // pred_check_branch
      %28 = sbr.rel (0) target = $region17
    $region16: #{forward.1} parent=1 // pred_region
      _
    $region17: #{forward.1} parent=1 // pred_fallthru
      _
    // Predicated region
    $region18: #{forward.1} parent=1 // pred_check
      _
    $region19: #{forward.1} parent=1 // pred_check_branch
      %30 = sbr.rel (0) target = $region21
    $region20: #{forward.1} parent=1 // pred_region
      %32 = dma.done [#allocation3], 8192
    $region21: #{forward.1} parent=1 // pred_fallthru
      _
    %v33 = vld [vmem:[%s0] sm:$0xff]
    %v34 = vld [vmem:[%s0 + $0x8] sm:$0xff]
    %37 = vst [vmem:[#allocation1] ss:$4 sm:$0xff] %v33
    %s38 = scalar_lea.vmem [#allocation1], 32
    %39 = vst [vmem:[%s38] ss:$4 sm:$0xff] %v34
    %v40 = vld.sshfl [vmem:[#allocation1] sm:$0xff pattern:$0x73625140]
    %v41 = vld.sshfl [vmem:[#allocation1 + $0x8] sm:$0xff pattern:$0x73625140]
    %v42 = vld.sshfl [vmem:[#allocation1 + $0x10] sm:$0xff pattern:$0x73625140]
    %v43 = vld.sshfl [vmem:[#allocation1 + $0x18] sm:$0xff pattern:$0x73625140]
    %v44 = vld.sshfl [vmem:[#allocation1 + $0x20] sm:$0xff pattern:$0x73625140]
    %v45 = vld.sshfl [vmem:[#allocation1 + $0x28] sm:$0xff pattern:$0x73625140]
    %v46 = vld.sshfl [vmem:[#allocation1 + $0x30] sm:$0xff pattern:$0x73625140]
    %v47 = vld.sshfl [vmem:[#allocation1 + $0x38] sm:$0xff pattern:$0x73625140]
    %v56 = vpack.c.bf16 %v40, %v40
    %v57 = vpack.c.bf16 %v41, %v41
    %v58 = vpack.c.bf16 %v42, %v42
    %v59 = vpack.c.bf16 %v43, %v43
    %v60 = vpack.c.bf16 %v44, %v44
    %v61 = vpack.c.bf16 %v45, %v45
    %v62 = vpack.c.bf16 %v46, %v46
    %v63 = vpack.c.bf16 %v47, %v47
    %v64 = vld [vmem:[#allocation2] sm:$0xf]
    %v65 = vld [vmem:[#allocation2 + $0x4] sm:$0xf]
    %v66 = vld [vmem:[#allocation2 + $0x8] sm:$0xf]
    %v67 = vld [vmem:[#allocation2 + $0xc] sm:$0xf]
    %v68 = vld [vmem:[#allocation2 + $0x10] sm:$0xf]
    %v69 = vld [vmem:[#allocation2 + $0x14] sm:$0xf]
    %v70 = vld [vmem:[#allocation2 + $0x18] sm:$0xf]
    %v71 = vld [vmem:[#allocation2 + $0x1c] sm:$0xf]
    %v72 = vld [vmem:[#allocation2 + $0x20] sm:$0xf]
    %v73 = vld [vmem:[#allocation2 + $0x24] sm:$0xf]
    %v74 = vld [vmem:[#allocation2 + $0x28] sm:$0xf]
    %v75 = vld [vmem:[#allocation2 + $0x2c] sm:$0xf]
    %v76 = vld [vmem:[#allocation2 + $0x30] sm:$0xf]
    %v77 = vld [vmem:[#allocation2 + $0x34] sm:$0xf]
    %v78 = vld [vmem:[#allocation2 + $0x38] sm:$0xf]
    %v79 = vld [vmem:[#allocation2 + $0x3c] sm:$0xf]
    %v80 = vld [vmem:[#allocation2 + $0x40] sm:$0xf]
    %v81 = vld [vmem:[#allocation2 + $0x44] sm:$0xf]
    %v82 = vld [vmem:[#allocation2 + $0x48] sm:$0xf]
    %v83 = vld [vmem:[#allocation2 + $0x4c] sm:$0xf]
    %v84 = vld [vmem:[#allocation2 + $0x50] sm:$0xf]
    %v85 = vld [vmem:[#allocation2 + $0x54] sm:$0xf]
    %v86 = vld [vmem:[#allocation2 + $0x58] sm:$0xf]
    %v87 = vld [vmem:[#allocation2 + $0x5c] sm:$0xf]
    %v88 = vld [vmem:[#allocation2 + $0x60] sm:$0xf]
    %v89 = vld [vmem:[#allocation2 + $0x64] sm:$0xf]
    %v90 = vld [vmem:[#allocation2 + $0x68] sm:$0xf]
    %v91 = vld [vmem:[#allocation2 + $0x6c] sm:$0xf]
    %v92 = vld [vmem:[#allocation2 + $0x70] sm:$0xf]
    %v93 = vld [vmem:[#allocation2 + $0x74] sm:$0xf]
    %v94 = vld [vmem:[#allocation2 + $0x78] sm:$0xf]
    %v95 = vld [vmem:[#allocation2 + $0x7c] sm:$0xf]
    %v96 = vld [vmem:[#allocation2 + $0x80] sm:$0xf]
    %v97 = vld [vmem:[#allocation2 + $0x84] sm:$0xf]
    %v98 = vld [vmem:[#allocation2 + $0x88] sm:$0xf]
    %v99 = vld [vmem:[#allocation2 + $0x8c] sm:$0xf]
    %v100 = vld [vmem:[#allocation2 + $0x90] sm:$0xf]
    %v101 = vld [vmem:[#allocation2 + $0x94] sm:$0xf]
    %v102 = vld [vmem:[#allocation2 + $0x98] sm:$0xf]
    %v103 = vld [vmem:[#allocation2 + $0x9c] sm:$0xf]
    %v104 = vld [vmem:[#allocation2 + $0xa0] sm:$0xf]
    %v105 = vld [vmem:[#allocation2 + $0xa4] sm:$0xf]
    %v106 = vld [vmem:[#allocation2 + $0xa8] sm:$0xf]
    %v107 = vld [vmem:[#allocation2 + $0xac] sm:$0xf]
    %v108 = vld [vmem:[#allocation2 + $0xb0] sm:$0xf]
    %v109 = vld [vmem:[#allocation2 + $0xb4] sm:$0xf]
    %v110 = vld [vmem:[#allocation2 + $0xb8] sm:$0xf]
    %v111 = vld [vmem:[#allocation2 + $0xbc] sm:$0xf]
    %v112 = vld [vmem:[#allocation2 + $0xc0] sm:$0xf]
    %v113 = vld [vmem:[#allocation2 + $0xc4] sm:$0xf]
    %v114 = vld [vmem:[#allocation2 + $0xc8] sm:$0xf]
    %v115 = vld [vmem:[#allocation2 + $0xcc] sm:$0xf]
    %v116 = vld [vmem:[#allocation2 + $0xd0] sm:$0xf]
    %v117 = vld [vmem:[#allocation2 + $0xd4] sm:$0xf]
    %v118 = vld [vmem:[#allocation2 + $0xd8] sm:$0xf]
    %v119 = vld [vmem:[#allocation2 + $0xdc] sm:$0xf]
    %v120 = vld [vmem:[#allocation2 + $0xe0] sm:$0xf]
    %v121 = vld [vmem:[#allocation2 + $0xe4] sm:$0xf]
    %v122 = vld [vmem:[#allocation2 + $0xe8] sm:$0xf]
    %v123 = vld [vmem:[#allocation2 + $0xec] sm:$0xf]
    %v124 = vld [vmem:[#allocation2 + $0xf0] sm:$0xf]
    %v125 = vld [vmem:[#allocation2 + $0xf4] sm:$0xf]
    %v126 = vld [vmem:[#allocation2 + $0xf8] sm:$0xf]
    %v127 = vld [vmem:[#allocation2 + $0xfc] sm:$0xf]
    %v128 = vld [vmem:[#allocation2 + $0x100] sm:$0xf]
    %v129 = vld [vmem:[#allocation2 + $0x104] sm:$0xf]
    %v130 = vld [vmem:[#allocation2 + $0x108] sm:$0xf]
    %v131 = vld [vmem:[#allocation2 + $0x10c] sm:$0xf]
    %v132 = vld [vmem:[#allocation2 + $0x110] sm:$0xf]
    %v133 = vld [vmem:[#allocation2 + $0x114] sm:$0xf]
    %v134 = vld [vmem:[#allocation2 + $0x118] sm:$0xf]
    %v135 = vld [vmem:[#allocation2 + $0x11c] sm:$0xf]
    %v136 = vld [vmem:[#allocation2 + $0x120] sm:$0xf]
    %v137 = vld [vmem:[#allocation2 + $0x124] sm:$0xf]
    %v138 = vld [vmem:[#allocation2 + $0x128] sm:$0xf]
    %v139 = vld [vmem:[#allocation2 + $0x12c] sm:$0xf]
    %v140 = vld [vmem:[#allocation2 + $0x130] sm:$0xf]
    %v141 = vld [vmem:[#allocation2 + $0x134] sm:$0xf]
    %v142 = vld [vmem:[#allocation2 + $0x138] sm:$0xf]
    %v143 = vld [vmem:[#allocation2 + $0x13c] sm:$0xf]
    %v144 = vld [vmem:[#allocation2 + $0x140] sm:$0xf]
    %v145 = vld [vmem:[#allocation2 + $0x144] sm:$0xf]
    %v146 = vld [vmem:[#allocation2 + $0x148] sm:$0xf]
    %v147 = vld [vmem:[#allocation2 + $0x14c] sm:$0xf]
    %v148 = vld [vmem:[#allocation2 + $0x150] sm:$0xf]
    %v149 = vld [vmem:[#allocation2 + $0x154] sm:$0xf]
    %v150 = vld [vmem:[#allocation2 + $0x158] sm:$0xf]
    %v151 = vld [vmem:[#allocation2 + $0x15c] sm:$0xf]
    %v152 = vld [vmem:[#allocation2 + $0x160] sm:$0xf]
    %v153 = vld [vmem:[#allocation2 + $0x164] sm:$0xf]
    %v154 = vld [vmem:[#allocation2 + $0x168] sm:$0xf]
    %v155 = vld [vmem:[#allocation2 + $0x16c] sm:$0xf]
    %v156 = vld [vmem:[#allocation2 + $0x170] sm:$0xf]
    %v157 = vld [vmem:[#allocation2 + $0x174] sm:$0xf]
    %v158 = vld [vmem:[#allocation2 + $0x178] sm:$0xf]
    %v159 = vld [vmem:[#allocation2 + $0x17c] sm:$0xf]
    %v160 = vld [vmem:[#allocation2 + $0x180] sm:$0xf]
    %v161 = vld [vmem:[#allocation2 + $0x184] sm:$0xf]
    %v162 = vld [vmem:[#allocation2 + $0x188] sm:$0xf]
    %v163 = vld [vmem:[#allocation2 + $0x18c] sm:$0xf]
    %v164 = vld [vmem:[#allocation2 + $0x190] sm:$0xf]
    %v165 = vld [vmem:[#allocation2 + $0x194] sm:$0xf]
    %v166 = vld [vmem:[#allocation2 + $0x198] sm:$0xf]
    %v167 = vld [vmem:[#allocation2 + $0x19c] sm:$0xf]
    %v168 = vld [vmem:[#allocation2 + $0x1a0] sm:$0xf]
    %v169 = vld [vmem:[#allocation2 + $0x1a4] sm:$0xf]
    %v170 = vld [vmem:[#allocation2 + $0x1a8] sm:$0xf]
    %v171 = vld [vmem:[#allocation2 + $0x1ac] sm:$0xf]
    %v172 = vld [vmem:[#allocation2 + $0x1b0] sm:$0xf]
    %v173 = vld [vmem:[#allocation2 + $0x1b4] sm:$0xf]
    %v174 = vld [vmem:[#allocation2 + $0x1b8] sm:$0xf]
    %v175 = vld [vmem:[#allocation2 + $0x1bc] sm:$0xf]
    %v176 = vld [vmem:[#allocation2 + $0x1c0] sm:$0xf]
    %v177 = vld [vmem:[#allocation2 + $0x1c4] sm:$0xf]
    %v178 = vld [vmem:[#allocation2 + $0x1c8] sm:$0xf]
    %v179 = vld [vmem:[#allocation2 + $0x1cc] sm:$0xf]
    %v180 = vld [vmem:[#allocation2 + $0x1d0] sm:$0xf]
    %v181 = vld [vmem:[#allocation2 + $0x1d4] sm:$0xf]
    %v182 = vld [vmem:[#allocation2 + $0x1d8] sm:$0xf]
    %v183 = vld [vmem:[#allocation2 + $0x1dc] sm:$0xf]
    %v184 = vld [vmem:[#allocation2 + $0x1e0] sm:$0xf]
    %v185 = vld [vmem:[#allocation2 + $0x1e4] sm:$0xf]
    %v186 = vld [vmem:[#allocation2 + $0x1e8] sm:$0xf]
    %v187 = vld [vmem:[#allocation2 + $0x1ec] sm:$0xf]
    %v188 = vld [vmem:[#allocation2 + $0x1f0] sm:$0xf]
    %v189 = vld [vmem:[#allocation2 + $0x1f4] sm:$0xf]
    %v190 = vld [vmem:[#allocation2 + $0x1f8] sm:$0xf]
    %v191 = vld [vmem:[#allocation2 + $0x1fc] sm:$0xf]
    %v192 = vld [vmem:[%s2] sm:$0x1]
    %v194 = vperm.slane %v192, 0
    %v324 = vunpack.c.l.b16 %v64
    %v325 = vunpack.c.l.b16 %v65
    %v326 = vunpack.c.l.b16 %v66
    %v327 = vunpack.c.l.b16 %v67
    %v328 = vunpack.c.l.b16 %v68
    %v329 = vunpack.c.l.b16 %v69
    %v330 = vunpack.c.l.b16 %v70
    %v331 = vunpack.c.l.b16 %v71
    %v332 = vunpack.c.l.b16 %v72
    %v333 = vunpack.c.l.b16 %v73
    %v334 = vunpack.c.l.b16 %v74
    %v335 = vunpack.c.l.b16 %v75
    %v336 = vunpack.c.l.b16 %v76
    %v337 = vunpack.c.l.b16 %v77
    %v338 = vunpack.c.l.b16 %v78
    %v339 = vunpack.c.l.b16 %v79
    %v340 = vunpack.c.l.b16 %v80
    %v341 = vunpack.c.l.b16 %v81
    %v342 = vunpack.c.l.b16 %v82
    %v343 = vunpack.c.l.b16 %v83
    %v344 = vunpack.c.l.b16 %v84
    %v345 = vunpack.c.l.b16 %v85
    %v346 = vunpack.c.l.b16 %v86
    %v347 = vunpack.c.l.b16 %v87
    %v348 = vunpack.c.l.b16 %v88
    %v349 = vunpack.c.l.b16 %v89
    %v350 = vunpack.c.l.b16 %v90
    %v351 = vunpack.c.l.b16 %v91
    %v352 = vunpack.c.l.b16 %v92
    %v353 = vunpack.c.l.b16 %v93
    %v354 = vunpack.c.l.b16 %v94
    %v355 = vunpack.c.l.b16 %v95
    %v356 = vunpack.c.l.b16 %v96
    %v357 = vunpack.c.l.b16 %v97
    %v358 = vunpack.c.l.b16 %v98
    %v359 = vunpack.c.l.b16 %v99
    %v360 = vunpack.c.l.b16 %v100
    %v361 = vunpack.c.l.b16 %v101
    %v362 = vunpack.c.l.b16 %v102
    %v363 = vunpack.c.l.b16 %v103
    %v364 = vunpack.c.l.b16 %v104
    %v365 = vunpack.c.l.b16 %v105
    %v366 = vunpack.c.l.b16 %v106
    %v367 = vunpack.c.l.b16 %v107
    %v368 = vunpack.c.l.b16 %v108
    %v369 = vunpack.c.l.b16 %v109
    %v370 = vunpack.c.l.b16 %v110
    %v371 = vunpack.c.l.b16 %v111
    %v372 = vunpack.c.l.b16 %v112
    %v373 = vunpack.c.l.b16 %v113
    %v374 = vunpack.c.l.b16 %v114
    %v375 = vunpack.c.l.b16 %v115
    %v376 = vunpack.c.l.b16 %v116
    %v377 = vunpack.c.l.b16 %v117
    %v378 = vunpack.c.l.b16 %v118
    %v379 = vunpack.c.l.b16 %v119
    %v380 = vunpack.c.l.b16 %v120
    %v381 = vunpack.c.l.b16 %v121
    %v382 = vunpack.c.l.b16 %v122
    %v383 = vunpack.c.l.b16 %v123
    %v384 = vunpack.c.l.b16 %v124
    %v385 = vunpack.c.l.b16 %v125
    %v386 = vunpack.c.l.b16 %v126
    %v387 = vunpack.c.l.b16 %v127
    %v388 = vunpack.c.l.b16 %v128
    %v389 = vunpack.c.l.b16 %v129
    %v390 = vunpack.c.l.b16 %v130
    %v391 = vunpack.c.l.b16 %v131
    %v392 = vunpack.c.l.b16 %v132
    %v393 = vunpack.c.l.b16 %v133
    %v394 = vunpack.c.l.b16 %v134
    %v395 = vunpack.c.l.b16 %v135
    %v396 = vunpack.c.l.b16 %v136
    %v397 = vunpack.c.l.b16 %v137
    %v398 = vunpack.c.l.b16 %v138
    %v399 = vunpack.c.l.b16 %v139
    %v400 = vunpack.c.l.b16 %v140
    %v401 = vunpack.c.l.b16 %v141
    %v402 = vunpack.c.l.b16 %v142
    %v403 = vunpack.c.l.b16 %v143
    %v404 = vunpack.c.l.b16 %v144
    %v405 = vunpack.c.l.b16 %v145
    %v406 = vunpack.c.l.b16 %v146
    %v407 = vunpack.c.l.b16 %v147
    %v408 = vunpack.c.l.b16 %v148
    %v409 = vunpack.c.l.b16 %v149
    %v410 = vunpack.c.l.b16 %v150
    %v411 = vunpack.c.l.b16 %v151
    %v412 = vunpack.c.l.b16 %v152
    %v413 = vunpack.c.l.b16 %v153
    %v414 = vunpack.c.l.b16 %v154
    %v415 = vunpack.c.l.b16 %v155
    %v416 = vunpack.c.l.b16 %v156
    %v417 = vunpack.c.l.b16 %v157
    %v418 = vunpack.c.l.b16 %v158
    %v419 = vunpack.c.l.b16 %v159
    %v420 = vunpack.c.l.b16 %v160
    %v421 = vunpack.c.l.b16 %v161
    %v422 = vunpack.c.l.b16 %v162
    %v423 = vunpack.c.l.b16 %v163
    %v424 = vunpack.c.l.b16 %v164
    %v425 = vunpack.c.l.b16 %v165
    %v426 = vunpack.c.l.b16 %v166
    %v427 = vunpack.c.l.b16 %v167
    %v428 = vunpack.c.l.b16 %v168
    %v429 = vunpack.c.l.b16 %v169
    %v430 = vunpack.c.l.b16 %v170
    %v431 = vunpack.c.l.b16 %v171
    %v432 = vunpack.c.l.b16 %v172
    %v433 = vunpack.c.l.b16 %v173
    %v434 = vunpack.c.l.b16 %v174
    %v435 = vunpack.c.l.b16 %v175
    %v436 = vunpack.c.l.b16 %v176
    %v437 = vunpack.c.l.b16 %v177
    %v438 = vunpack.c.l.b16 %v178
    %v439 = vunpack.c.l.b16 %v179
    %v440 = vunpack.c.l.b16 %v180
    %v441 = vunpack.c.l.b16 %v181
    %v442 = vunpack.c.l.b16 %v182
    %v443 = vunpack.c.l.b16 %v183
    %v444 = vunpack.c.l.b16 %v184
    %v445 = vunpack.c.l.b16 %v185
    %v446 = vunpack.c.l.b16 %v186
    %v447 = vunpack.c.l.b16 %v187
    %v448 = vunpack.c.l.b16 %v188
    %v449 = vunpack.c.l.b16 %v189
    %v450 = vunpack.c.l.b16 %v190
    %v451 = vunpack.c.l.b16 %v191
    %v452 = vpack.c.b16 %v325, %v324
    %v453 = vpack.c.b16 %v327, %v326
    %v454 = vpack.c.b16 %v329, %v328
    %v455 = vpack.c.b16 %v331, %v330
    %v456 = vpack.c.b16 %v333, %v332
    %v457 = vpack.c.b16 %v335, %v334
    %v458 = vpack.c.b16 %v337, %v336
    %v459 = vpack.c.b16 %v339, %v338
    %v460 = vpack.c.b16 %v341, %v340
    %v461 = vpack.c.b16 %v343, %v342
    %v462 = vpack.c.b16 %v345, %v344
    %v463 = vpack.c.b16 %v347, %v346
    %v464 = vpack.c.b16 %v349, %v348
    %v465 = vpack.c.b16 %v351, %v350
    %v466 = vpack.c.b16 %v353, %v352
    %v467 = vpack.c.b16 %v355, %v354
    %v468 = vpack.c.b16 %v357, %v356
    %v469 = vpack.c.b16 %v359, %v358
    %v470 = vpack.c.b16 %v361, %v360
    %v471 = vpack.c.b16 %v363, %v362
    %v472 = vpack.c.b16 %v365, %v364
    %v473 = vpack.c.b16 %v367, %v366
    %v474 = vpack.c.b16 %v369, %v368
    %v475 = vpack.c.b16 %v371, %v370
    %v476 = vpack.c.b16 %v373, %v372
    %v477 = vpack.c.b16 %v375, %v374
    %v478 = vpack.c.b16 %v377, %v376
    %v479 = vpack.c.b16 %v379, %v378
    %v480 = vpack.c.b16 %v381, %v380
    %v481 = vpack.c.b16 %v383, %v382
    %v482 = vpack.c.b16 %v385, %v384
    %v483 = vpack.c.b16 %v387, %v386
    %v484 = vpack.c.b16 %v389, %v388
    %v485 = vpack.c.b16 %v391, %v390
    %v486 = vpack.c.b16 %v393, %v392
    %v487 = vpack.c.b16 %v395, %v394
    %v488 = vpack.c.b16 %v397, %v396
    %v489 = vpack.c.b16 %v399, %v398
    %v490 = vpack.c.b16 %v401, %v400
    %v491 = vpack.c.b16 %v403, %v402
    %v492 = vpack.c.b16 %v405, %v404
    %v493 = vpack.c.b16 %v407, %v406
    %v494 = vpack.c.b16 %v409, %v408
    %v495 = vpack.c.b16 %v411, %v410
    %v496 = vpack.c.b16 %v413, %v412
    %v497 = vpack.c.b16 %v415, %v414
    %v498 = vpack.c.b16 %v417, %v416
    %v499 = vpack.c.b16 %v419, %v418
    %v500 = vpack.c.b16 %v421, %v420
    %v501 = vpack.c.b16 %v423, %v422
    %v502 = vpack.c.b16 %v425, %v424
    %v503 = vpack.c.b16 %v427, %v426
    %v504 = vpack.c.b16 %v429, %v428
    %v505 = vpack.c.b16 %v431, %v430
    %v506 = vpack.c.b16 %v433, %v432
    %v507 = vpack.c.b16 %v435, %v434
    %v508 = vpack.c.b16 %v437, %v436
    %v509 = vpack.c.b16 %v439, %v438
    %v510 = vpack.c.b16 %v441, %v440
    %v511 = vpack.c.b16 %v443, %v442
    %v512 = vpack.c.b16 %v445, %v444
    %v513 = vpack.c.b16 %v447, %v446
    %v514 = vpack.c.b16 %v449, %v448
    %v515 = vpack.c.b16 %v451, %v450
    %580 = vmatpush.bf16.msra.mxu0 %v459
    %581 = vmatpush.bf16.msra.mxu0 %v458
    %582 = vmatpush.bf16.msra.mxu0 %v457
    %583 = vmatpush.bf16.msra.mxu0 %v456
    %584 = vmatpush.bf16.msra.mxu0 %v455
    %585 = vmatpush.bf16.msra.mxu0 %v454
    %586 = vmatpush.bf16.msra.mxu0 %v453
    %587 = vmatpush.bf16.msra.mxu0 %v452
    %588 = vmatmul.bf16.gmra.mxu0 %v56
    %v589 = vpop.f32.mrf.mxu0
    %v590 = vadd.f32 %v194, %v589
    %v591 = vpop.f32.mrf.mxu0
    %592 = vdwg.mxu0
    %593 = vmatpush.bf16.msra.mxu0 %v467
    %594 = vmatpush.bf16.msra.mxu0 %v466
    %595 = vmatpush.bf16.msra.mxu0 %v465
    %596 = vmatpush.bf16.msra.mxu0 %v464
    %597 = vmatpush.bf16.msra.mxu0 %v463
    %598 = vmatpush.bf16.msra.mxu0 %v462
    %599 = vmatpush.bf16.msra.mxu0 %v461
    %600 = vmatpush.bf16.msra.mxu0 %v460
    %601 = vmatmul.bf16.gmra.mxu0 %v57
    %v602 = vpop.f32.mrf.mxu0
    %v603 = vadd.f32 %v590, %v602
    %v604 = vpop.f32.mrf.mxu0
    %605 = vdwg.mxu0
    %606 = vmatpush.bf16.msra.mxu0 %v475
    %607 = vmatpush.bf16.msra.mxu0 %v474
    %608 = vmatpush.bf16.msra.mxu0 %v473
    %609 = vmatpush.bf16.msra.mxu0 %v472
    %610 = vmatpush.bf16.msra.mxu0 %v471
    %611 = vmatpush.bf16.msra.mxu0 %v470
    %612 = vmatpush.bf16.msra.mxu0 %v469
    %613 = vmatpush.bf16.msra.mxu0 %v468
    %614 = vmatmul.bf16.gmra.mxu0 %v58
    %v615 = vpop.f32.mrf.mxu0
    %v616 = vadd.f32 %v603, %v615
    %v617 = vpop.f32.mrf.mxu0
    %618 = vdwg.mxu0
    %619 = vmatpush.bf16.msra.mxu0 %v483
    %620 = vmatpush.bf16.msra.mxu0 %v482
    %621 = vmatpush.bf16.msra.mxu0 %v481
    %622 = vmatpush.bf16.msra.mxu0 %v480
    %623 = vmatpush.bf16.msra.mxu0 %v479
    %624 = vmatpush.bf16.msra.mxu0 %v478
    %625 = vmatpush.bf16.msra.mxu0 %v477
    %626 = vmatpush.bf16.msra.mxu0 %v476
    %627 = vmatmul.bf16.gmra.mxu0 %v59
    %v628 = vpop.f32.mrf.mxu0
    %v629 = vadd.f32 %v616, %v628
    %v630 = vpop.f32.mrf.mxu0
    %631 = vdwg.mxu0
    %632 = vmatpush.bf16.msra.mxu0 %v491
    %633 = vmatpush.bf16.msra.mxu0 %v490
    %634 = vmatpush.bf16.msra.mxu0 %v489
    %635 = vmatpush.bf16.msra.mxu0 %v488
    %636 = vmatpush.bf16.msra.mxu0 %v487
    %637 = vmatpush.bf16.msra.mxu0 %v486
    %638 = vmatpush.bf16.msra.mxu0 %v485
    %639 = vmatpush.bf16.msra.mxu0 %v484
    %640 = vmatmul.bf16.gmra.mxu0 %v60
    %v641 = vpop.f32.mrf.mxu0
    %v642 = vadd.f32 %v629, %v641
    %v643 = vpop.f32.mrf.mxu0
    %644 = vdwg.mxu0
    %645 = vmatpush.bf16.msra.mxu0 %v499
    %646 = vmatpush.bf16.msra.mxu0 %v498
    %647 = vmatpush.bf16.msra.mxu0 %v497
    %648 = vmatpush.bf16.msra.mxu0 %v496
    %649 = vmatpush.bf16.msra.mxu0 %v495
    %650 = vmatpush.bf16.msra.mxu0 %v494
    %651 = vmatpush.bf16.msra.mxu0 %v493
    %652 = vmatpush.bf16.msra.mxu0 %v492
    %653 = vmatmul.bf16.gmra.mxu0 %v61
    %v654 = vpop.f32.mrf.mxu0
    %v655 = vadd.f32 %v642, %v654
    %v656 = vpop.f32.mrf.mxu0
    %657 = vdwg.mxu0
    %658 = vmatpush.bf16.msra.mxu0 %v507
    %659 = vmatpush.bf16.msra.mxu0 %v506
    %660 = vmatpush.bf16.msra.mxu0 %v505
    %661 = vmatpush.bf16.msra.mxu0 %v504
    %662 = vmatpush.bf16.msra.mxu0 %v503
    %663 = vmatpush.bf16.msra.mxu0 %v502
    %664 = vmatpush.bf16.msra.mxu0 %v501
    %665 = vmatpush.bf16.msra.mxu0 %v500
    %666 = vmatmul.bf16.gmra.mxu0 %v62
    %v667 = vpop.f32.mrf.mxu0
    %v668 = vadd.f32 %v655, %v667
    %v669 = vpop.f32.mrf.mxu0
    %670 = vdwg.mxu0
    %671 = vmatpush.bf16.msra.mxu0 %v515
    %672 = vmatpush.bf16.msra.mxu0 %v514
    %673 = vmatpush.bf16.msra.mxu0 %v513
    %674 = vmatpush.bf16.msra.mxu0 %v512
    %675 = vmatpush.bf16.msra.mxu0 %v511
    %676 = vmatpush.bf16.msra.mxu0 %v510
    %677 = vmatpush.bf16.msra.mxu0 %v509
    %678 = vmatpush.bf16.msra.mxu0 %v508
    %679 = vmatmul.bf16.gmra.mxu0 %v63
    %v680 = vpop.f32.mrf.mxu0
    %v681 = vadd.f32 %v668, %v680
    %v682 = vpop.f32.mrf.mxu0
    %683 = vdwg.mxu0
    %vm684 = vcmp.ge.f32.partialorder %v681, 0.5
    %v685 = vsel %vm684, 1, 0
    %v686 = vcvt.s32.f32 %v685
    %v687 = vpack.c.bf16 %v686, %v686
    %v688 = vld [vmem:[%s3] sm:$0xf]
    %v689 = vld [vmem:[%s3 + $0x4] sm:$0xf]
    %v690 = vld [vmem:[%s3 + $0x8] sm:$0xf]
    %v691 = vld [vmem:[%s3 + $0xc] sm:$0xf]
    %v692 = vld [vmem:[%s3 + $0x10] sm:$0xf]
    %v693 = vld [vmem:[%s3 + $0x14] sm:$0xf]
    %v694 = vld [vmem:[%s3 + $0x18] sm:$0xf]
    %v695 = vld [vmem:[%s3 + $0x1c] sm:$0xf]
    %v696 = vld [vmem:[%s3 + $0x20] sm:$0xf]
    %v697 = vld [vmem:[%s3 + $0x24] sm:$0xf]
    %v698 = vld [vmem:[%s3 + $0x28] sm:$0xf]
    %v699 = vld [vmem:[%s3 + $0x2c] sm:$0xf]
    %v700 = vld [vmem:[%s3 + $0x30] sm:$0xf]
    %v701 = vld [vmem:[%s3 + $0x34] sm:$0xf]
    %v702 = vld [vmem:[%s3 + $0x38] sm:$0xf]
    %v703 = vld [vmem:[%s3 + $0x3c] sm:$0xf]
    %v720 = vunpack.c.l.b16 %v688
    %v721 = vunpack.c.l.b16 %v689
    %v722 = vunpack.c.l.b16 %v690
    %v723 = vunpack.c.l.b16 %v691
    %v724 = vunpack.c.l.b16 %v692
    %v725 = vunpack.c.l.b16 %v693
    %v726 = vunpack.c.l.b16 %v694
    %v727 = vunpack.c.l.b16 %v695
    %v728 = vunpack.c.l.b16 %v696
    %v729 = vunpack.c.l.b16 %v697
    %v730 = vunpack.c.l.b16 %v698
    %v731 = vunpack.c.l.b16 %v699
    %v732 = vunpack.c.l.b16 %v700
    %v733 = vunpack.c.l.b16 %v701
    %v734 = vunpack.c.l.b16 %v702
    %v735 = vunpack.c.l.b16 %v703
    %v736 = vpack.c.b16 %v721, %v720
    %v737 = vpack.c.b16 %v723, %v722
    %v738 = vpack.c.b16 %v725, %v724
    %v739 = vpack.c.b16 %v727, %v726
    %v740 = vpack.c.b16 %v729, %v728
    %v741 = vpack.c.b16 %v731, %v730
    %v742 = vpack.c.b16 %v733, %v732
    %v743 = vpack.c.b16 %v735, %v734
    %752 = vmatpush.bf16.msra.mxu0 %v743
    %753 = vmatpush.bf16.msra.mxu0 %v742
    %754 = vmatpush.bf16.msra.mxu0 %v741
    %755 = vmatpush.bf16.msra.mxu0 %v740
    %756 = vmatpush.bf16.msra.mxu0 %v739
    %757 = vmatpush.bf16.msra.mxu0 %v738
    %758 = vmatpush.bf16.msra.mxu0 %v737
    %759 = vmatpush.bf16.msra.mxu0 %v736
    %760 = vmatmul.bf16.gmra.mxu0 %v687
    %v761 = vpop.f32.mrf.mxu0
    %v762 = vadd.f32 0.0, %v761
    %v763 = vpop.f32.mrf.mxu0
    %764 = vdwg.mxu0
    %v765 = vpack.c.bf16 %v762, %v762
    %766 = vst [vmem:[%s4] sm:$0x1] %v765
    // Predicated region
    $region22: #{forward.1} parent=1 // pred_check
      _
    $region23: #{forward.1} parent=1 // pred_check_branch
      %768 = sbr.rel (0) target = $region25
    $region24: #{forward.1} parent=1 // pred_region
      _
    $region25: #{forward.1} parent=1 // pred_fallthru
      _
    // Predicated region
    $region26: #{forward.1} parent=1 // pred_check
      _
    $region27: #{forward.1} parent=1 // pred_check_branch
      %770 = sbr.rel (0) target = $region29
    $region28: #{forward.1} parent=1 // pred_region
      _
    $region29: #{forward.1} parent=1 // pred_fallthru
      _
    %771 = vsyncpa [#allocation3], 1

</llo_original>
